<compile_context>
chip_gen: v6e
topology: v6e:2x2x1
jax: 0.10.0
libtpu: 0.0.40
codegen_flags: <defaults>
</compile_context>

<pallas_src>
import numpy as np
import jax
import jax.numpy as jnp
from jax.experimental import pallas as pl
from jax.experimental.pallas import tpu as pltpu

B, S, D = 8, 16, 128        # batch, seq, d_model (config.d_model)
LANES = 128                 # lane-dense output slab width
VOCAB = 64
EOS_ID = 2


def _head_kernel(idx_ref,               # (B,)    int32 SMEM   flat row index of last <eos>
                 h_hbm,                 # (B*S,D) f32   HBM    hidden rows (never fully read)
                 w1_ref,                # (D, D)  bf16  VMEM   dense.weight.T
                 b1_ref,                # (1, D)  f32   VMEM   dense.bias
                 w2_ref,                # (1, D)  f32   VMEM   out_proj.weight
                 b2_ref,                # (1,)    f32   SMEM   out_proj.bias
                 y_ref,                 # (B, 1)  f32   VMEM   labels
                 prob_ref,              # (B, LANES) f32       prob broadcast across lanes
                 loss_ref,              # (1, LANES) f32       mean BCE loss broadcast
                 rows_vmem,             # (B, D)  f32   VMEM   scratch for gathered rows
                 sem):                  # (B,)    DMA sems
    # --- batched EOS-row gather: B row DMAs HBM -> VMEM, issued back-to-back, one wait pass
    def _row_copy(i):
        return pltpu.make_async_copy(
            h_hbm.at[pl.ds(idx_ref[i], 1), :],
            rows_vmem.at[pl.ds(i, 1), :],
            sem.at[i])

    for i in range(B):
        _row_copy(i).start()
    for i in range(B):
        _row_copy(i).wait()

    vec = rows_vmem[...]                                          # (B, D) f32

    # --- RobertaClassificationHead (dropout == identity in eval): dense -> tanh
    # Single (B, D) x (D, D) matmul: bf16 operands on the MXU, f32 accumulate.
    x = jnp.tanh(
        jnp.dot(vec.astype(jnp.bfloat16), w1_ref[...],
                preferred_element_type=jnp.float32)
        + b1_ref[...])                                            # (B, D) f32

    # --- out_proj (D -> 1): one VPU multiply + one lane reduce (kept off the MXU)
    logits = jnp.sum(x * w2_ref[...], axis=-1, keepdims=True) + b2_ref[0]   # (B, 1)
    prob = 1.0 / (1.0 + jnp.exp(-logits))                                   # torch.sigmoid

    # --- BCE terms (same epsilon form as the torch reference) + fused mean
    y = y_ref[...]                                                          # (B, 1)
    ll = jnp.log(prob + 1e-10) * y + jnp.log((1.0 - prob) + 1e-10) * (1.0 - y)
    loss = -jnp.sum(ll, axis=0, keepdims=True) * (1.0 / B)                  # (1, 1)

    # --- lane-dense (unmasked) stores
    prob_ref[...] = jnp.broadcast_to(prob, (B, LANES))
    loss_ref[...] = jnp.broadcast_to(loss, (1, LANES))


@jax.jit
def model_forward(hidden_states, eos_flat_idx, params, labels):
    """Fused EOS gather + classification head + sigmoid + BCE loss.

    Returns (loss_scalar, prob[B, 1]) like Model.forward(labels=...)."""
    w1, b1, w2, b2 = params
    hidden_rows = hidden_states.reshape(B * S, D)        # free reshape; stays in HBM
    w1_bf16 = w1.astype(jnp.bfloat16)                    # MXU-native operand
    labels2d = labels.reshape(B, 1)

    prob_slab, loss_slab = pl.pallas_call(
        _head_kernel,
        out_shape=(jax.ShapeDtypeStruct((B, LANES), jnp.float32),
                   jax.ShapeDtypeStruct((1, LANES), jnp.float32)),
        in_specs=[
            pl.BlockSpec(memory_space=pltpu.MemorySpace.SMEM),   # eos_flat_idx
            pl.BlockSpec(memory_space=pl.ANY),                    # hidden rows (HBM, manual DMA)
            pl.BlockSpec(memory_space=pltpu.MemorySpace.VMEM),   # w1 (bf16)
            pl.BlockSpec(memory_space=pltpu.MemorySpace.VMEM),   # b1
            pl.BlockSpec(memory_space=pltpu.MemorySpace.VMEM),   # w2
            pl.BlockSpec(memory_space=pltpu.MemorySpace.SMEM),   # b2
            pl.BlockSpec(memory_space=pltpu.MemorySpace.VMEM),   # labels
        ],
        out_specs=(pl.BlockSpec(memory_space=pltpu.MemorySpace.VMEM),
                   pl.BlockSpec(memory_space=pltpu.MemorySpace.VMEM)),
        scratch_shapes=[pltpu.VMEM((B, D), jnp.float32),
                        pltpu.SemaphoreType.DMA((B,))],
    )(eos_flat_idx, hidden_rows, w1_bf16, b1, w2, b2, labels2d)

    prob = prob_slab[:, 0:1]      # (B, 1)  == torch.sigmoid(logits)
    loss = loss_slab[0, 0]        # scalar  == -mean(BCE terms)  (mean fused in-kernel)
    return loss, prob


def init_params(key, d_model):
    # Synthetic init matching nn.Linear shapes:
    #   dense:    weight.T (d_model, d_model), bias (1, d_model)
    #   out_proj: weight   (1, d_model),       bias (1,)
    k1, k2, k3, k4 = jax.random.split(key, 4)
    lim = 1.0 / np.sqrt(d_model)
    w1 = jax.random.uniform(k1, (d_model, d_model), jnp.float32, -lim, lim)
    b1 = jax.random.uniform(k2, (1, d_model), jnp.float32, -lim, lim)
    w2 = jax.random.uniform(k3, (1, d_model), jnp.float32, -lim, lim)
    b2 = jax.random.uniform(k4, (1,), jnp.float32, -lim, lim)
    return w1, b1, w2, b2


if __name__ == "__main__":
    key = jax.random.PRNGKey(0)
    k_ids, k_emb, k_params, k_labels = jax.random.split(key, 4)

    # input_ids: random tokens in [3, VOCAB) with exactly one EOS (=2) per row.
    ids = jax.random.randint(k_ids, (B, S), 3, VOCAB, dtype=jnp.int32)
    eos_pos = (jnp.arange(B, dtype=jnp.int32) % 4) + (S - 4)   # varied EOS positions
    ids = ids.at[jnp.arange(B), eos_pos].set(EOS_ID)

    # TODO(synk): the CodeT5 encoder-decoder stack (self.encoder) is an external
    # HuggingFace module; its last decoder hidden state is stood in for by a
    # deterministic embedding lookup so the fused head kernel sees realistic inputs.
    emb = jax.random.normal(k_emb, (VOCAB, D), jnp.float32) * 0.02
    hidden_states = emb[ids]                                   # (B, S, D)

    # eos_mask = input_ids.eq(2); all examples must have the same number of <eos>.
    eos_mask = (ids == EOS_ID)
    counts = np.asarray(jnp.sum(eos_mask, axis=1))
    assert len(np.unique(counts)) == 1, \
        "All examples must have the same number of <eos> tokens."
    pos = jnp.arange(S, dtype=jnp.int32)
    last_eos = jnp.max(jnp.where(eos_mask, pos[None, :], -1), axis=1).astype(jnp.int32)
    eos_flat_idx = (jnp.arange(B, dtype=jnp.int32) * S + last_eos).astype(jnp.int32)

    params = init_params(k_params, D)
    labels = jax.random.bernoulli(k_labels, 0.5, (B,)).astype(jnp.float32)   # (B,)

    loss, prob = model_forward(hidden_states, eos_flat_idx, params, labels)
    jax.block_until_ready((loss, prob))

    # --- References ---
    w1, b1, w2, b2 = params
    vec_ref = hidden_states[jnp.arange(B), last_eos]                 # (B, D)

    # (1) bf16-operand reference (same MXU casting as the kernel) — tight tolerance.
    x_bf = jnp.tanh(jnp.dot(vec_ref.astype(jnp.bfloat16), w1.astype(jnp.bfloat16),
                            preferred_element_type=jnp.float32) + b1)
    logit_bf = jnp.sum(x_bf * w2, axis=-1, keepdims=True) + b2[0]
    prob_bf = 1.0 / (1.0 + jnp.exp(-logit_bf))
    ll_bf = (jnp.log(prob_bf[:, 0] + 1e-10) * labels
             + jnp.log(1.0 - prob_bf[:, 0] + 1e-10) * (1.0 - labels))
    loss_bf = -jnp.mean(ll_bf)
    np.testing.assert_allclose(np.asarray(prob), np.asarray(prob_bf), rtol=5e-3, atol=5e-3)
    np.testing.assert_allclose(float(loss), float(loss_bf), rtol=5e-3, atol=5e-3)

    # (2) full-f32 torch math (looser tolerance; kernel uses bf16 MXU operands).
    x_f32 = jnp.tanh(vec_ref @ w1 + b1)
    logit_f32 = jnp.sum(x_f32 * w2, axis=-1, keepdims=True) + b2[0]
    prob_f32 = 1.0 / (1.0 + jnp.exp(-logit_f32))
    ll_f32 = (jnp.log(prob_f32[:, 0] + 1e-10) * labels
              + jnp.log(1.0 - prob_f32[:, 0] + 1e-10) * (1.0 - labels))
    loss_f32 = -jnp.mean(ll_f32)
    np.testing.assert_allclose(np.asarray(prob), np.asarray(prob_f32), rtol=2e-2, atol=2e-2)
    np.testing.assert_allclose(float(loss), float(loss_f32), rtol=2e-2, atol=2e-2)

    print("KERNEL_OK")
</pallas_src>

<mosaic_0001>
module attributes {stable_mosaic.version = 11 : i64} {
  func.func @_head_kernel(%arg0: memref<8xi32, #tpu.memory_space<smem>>, %arg1: memref<128x128xf32, #tpu.memory_space<any>>, %arg2: memref<128x128xbf16, #tpu.memory_space<vmem>>, %arg3: memref<1x128xf32, #tpu.memory_space<vmem>>, %arg4: memref<1x128xf32, #tpu.memory_space<vmem>>, %arg5: memref<1xf32, #tpu.memory_space<smem>>, %arg6: memref<8x1xf32, #tpu.memory_space<vmem>>, %arg7: memref<8x128xf32, #tpu.memory_space<vmem>>, %arg8: memref<1x128xf32, #tpu.memory_space<vmem>>, %arg9: memref<8x128xf32, #tpu.memory_space<vmem>>, %arg10: memref<8x!tpu.dma_semaphore, #tpu.memory_space<semaphore_mem>>) attributes {dimension_semantics = [], scalar_prefetch = 0 : i64, scratch_operands = 2 : i64, tpu.core_type = #tpu.core_type<tc>} {
    %c0 = arith.constant 0 : index
    %0 = memref.load %arg0[%c0] : memref<8xi32, #tpu.memory_space<smem>>
    %c0_i32 = arith.constant 0 : i32
    %c0_i32_0 = arith.constant 0 : i32
    %1 = tpu.memref_slice %arg1[%0, %c0_i32_0] : memref<128x128xf32, #tpu.memory_space<any>> -> memref<1x128xf32, #tpu.memory_space<any>>
    %c0_i32_1 = arith.constant 0 : i32
    %c0_i32_2 = arith.constant 0 : i32
    %2 = tpu.memref_slice %arg9[%c0_i32_1, %c0_i32_2] : memref<8x128xf32, #tpu.memory_space<vmem>> -> memref<1x128xf32, #tpu.memory_space<vmem>>
    %3 = tpu.memref_slice %arg10[%c0_i32] : memref<8x!tpu.dma_semaphore, #tpu.memory_space<semaphore_mem>> -> memref<1x!tpu.dma_semaphore, #tpu.memory_space<semaphore_mem>>
    %4 = tpu.memref_squeeze %3 : memref<1x!tpu.dma_semaphore, #tpu.memory_space<semaphore_mem>> -> memref<!tpu.dma_semaphore, #tpu.memory_space<semaphore_mem>>
    tpu.enqueue_dma source(%1 : memref<1x128xf32, #tpu.memory_space<any>>) target(%2 : memref<1x128xf32, #tpu.memory_space<vmem>>) target_semaphore(%4 : memref<!tpu.dma_semaphore, #tpu.memory_space<semaphore_mem>>)
    %c1 = arith.constant 1 : index
    %5 = memref.load %arg0[%c1] : memref<8xi32, #tpu.memory_space<smem>>
    %c1_i32 = arith.constant 1 : i32
    %c0_i32_3 = arith.constant 0 : i32
    %6 = tpu.memref_slice %arg1[%5, %c0_i32_3] : memref<128x128xf32, #tpu.memory_space<any>> -> memref<1x128xf32, #tpu.memory_space<any>>
    %c1_i32_4 = arith.constant 1 : i32
    %c0_i32_5 = arith.constant 0 : i32
    %7 = tpu.memref_slice %arg9[%c1_i32_4, %c0_i32_5] : memref<8x128xf32, #tpu.memory_space<vmem>> -> memref<1x128xf32, #tpu.memory_space<vmem>>
    %8 = tpu.memref_slice %arg10[%c1_i32] : memref<8x!tpu.dma_semaphore, #tpu.memory_space<semaphore_mem>> -> memref<1x!tpu.dma_semaphore, #tpu.memory_space<semaphore_mem>>
    %9 = tpu.memref_squeeze %8 : memref<1x!tpu.dma_semaphore, #tpu.memory_space<semaphore_mem>> -> memref<!tpu.dma_semaphore, #tpu.memory_space<semaphore_mem>>
    tpu.enqueue_dma source(%6 : memref<1x128xf32, #tpu.memory_space<any>>) target(%7 : memref<1x128xf32, #tpu.memory_space<vmem>>) target_semaphore(%9 : memref<!tpu.dma_semaphore, #tpu.memory_space<semaphore_mem>>)
    %c2 = arith.constant 2 : index
    %10 = memref.load %arg0[%c2] : memref<8xi32, #tpu.memory_space<smem>>
    %c2_i32 = arith.constant 2 : i32
    %c0_i32_6 = arith.constant 0 : i32
    %11 = tpu.memref_slice %arg1[%10, %c0_i32_6] : memref<128x128xf32, #tpu.memory_space<any>> -> memref<1x128xf32, #tpu.memory_space<any>>
    %c2_i32_7 = arith.constant 2 : i32
    %c0_i32_8 = arith.constant 0 : i32
    %12 = tpu.memref_slice %arg9[%c2_i32_7, %c0_i32_8] : memref<8x128xf32, #tpu.memory_space<vmem>> -> memref<1x128xf32, #tpu.memory_space<vmem>>
    %13 = tpu.memref_slice %arg10[%c2_i32] : memref<8x!tpu.dma_semaphore, #tpu.memory_space<semaphore_mem>> -> memref<1x!tpu.dma_semaphore, #tpu.memory_space<semaphore_mem>>
    %14 = tpu.memref_squeeze %13 : memref<1x!tpu.dma_semaphore, #tpu.memory_space<semaphore_mem>> -> memref<!tpu.dma_semaphore, #tpu.memory_space<semaphore_mem>>
    tpu.enqueue_dma source(%11 : memref<1x128xf32, #tpu.memory_space<any>>) target(%12 : memref<1x128xf32, #tpu.memory_space<vmem>>) target_semaphore(%14 : memref<!tpu.dma_semaphore, #tpu.memory_space<semaphore_mem>>)
    %c3 = arith.constant 3 : index
    %15 = memref.load %arg0[%c3] : memref<8xi32, #tpu.memory_space<smem>>
    %c3_i32 = arith.constant 3 : i32
    %c0_i32_9 = arith.constant 0 : i32
    %16 = tpu.memref_slice %arg1[%15, %c0_i32_9] : memref<128x128xf32, #tpu.memory_space<any>> -> memref<1x128xf32, #tpu.memory_space<any>>
    %c3_i32_10 = arith.constant 3 : i32
    %c0_i32_11 = arith.constant 0 : i32
    %17 = tpu.memref_slice %arg9[%c3_i32_10, %c0_i32_11] : memref<8x128xf32, #tpu.memory_space<vmem>> -> memref<1x128xf32, #tpu.memory_space<vmem>>
    %18 = tpu.memref_slice %arg10[%c3_i32] : memref<8x!tpu.dma_semaphore, #tpu.memory_space<semaphore_mem>> -> memref<1x!tpu.dma_semaphore, #tpu.memory_space<semaphore_mem>>
    %19 = tpu.memref_squeeze %18 : memref<1x!tpu.dma_semaphore, #tpu.memory_space<semaphore_mem>> -> memref<!tpu.dma_semaphore, #tpu.memory_space<semaphore_mem>>
    tpu.enqueue_dma source(%16 : memref<1x128xf32, #tpu.memory_space<any>>) target(%17 : memref<1x128xf32, #tpu.memory_space<vmem>>) target_semaphore(%19 : memref<!tpu.dma_semaphore, #tpu.memory_space<semaphore_mem>>)
    %c4 = arith.constant 4 : index
    %20 = memref.load %arg0[%c4] : memref<8xi32, #tpu.memory_space<smem>>
    %c4_i32 = arith.constant 4 : i32
    %c0_i32_12 = arith.constant 0 : i32
    %21 = tpu.memref_slice %arg1[%20, %c0_i32_12] : memref<128x128xf32, #tpu.memory_space<any>> -> memref<1x128xf32, #tpu.memory_space<any>>
    %c4_i32_13 = arith.constant 4 : i32
    %c0_i32_14 = arith.constant 0 : i32
    %22 = tpu.memref_slice %arg9[%c4_i32_13, %c0_i32_14] : memref<8x128xf32, #tpu.memory_space<vmem>> -> memref<1x128xf32, #tpu.memory_space<vmem>>
    %23 = tpu.memref_slice %arg10[%c4_i32] : memref<8x!tpu.dma_semaphore, #tpu.memory_space<semaphore_mem>> -> memref<1x!tpu.dma_semaphore, #tpu.memory_space<semaphore_mem>>
    %24 = tpu.memref_squeeze %23 : memref<1x!tpu.dma_semaphore, #tpu.memory_space<semaphore_mem>> -> memref<!tpu.dma_semaphore, #tpu.memory_space<semaphore_mem>>
    tpu.enqueue_dma source(%21 : memref<1x128xf32, #tpu.memory_space<any>>) target(%22 : memref<1x128xf32, #tpu.memory_space<vmem>>) target_semaphore(%24 : memref<!tpu.dma_semaphore, #tpu.memory_space<semaphore_mem>>)
    %c5 = arith.constant 5 : index
    %25 = memref.load %arg0[%c5] : memref<8xi32, #tpu.memory_space<smem>>
    %c5_i32 = arith.constant 5 : i32
    %c0_i32_15 = arith.constant 0 : i32
    %26 = tpu.memref_slice %arg1[%25, %c0_i32_15] : memref<128x128xf32, #tpu.memory_space<any>> -> memref<1x128xf32, #tpu.memory_space<any>>
    %c5_i32_16 = arith.constant 5 : i32
    %c0_i32_17 = arith.constant 0 : i32
    %27 = tpu.memref_slice %arg9[%c5_i32_16, %c0_i32_17] : memref<8x128xf32, #tpu.memory_space<vmem>> -> memref<1x128xf32, #tpu.memory_space<vmem>>
    %28 = tpu.memref_slice %arg10[%c5_i32] : memref<8x!tpu.dma_semaphore, #tpu.memory_space<semaphore_mem>> -> memref<1x!tpu.dma_semaphore, #tpu.memory_space<semaphore_mem>>
    %29 = tpu.memref_squeeze %28 : memref<1x!tpu.dma_semaphore, #tpu.memory_space<semaphore_mem>> -> memref<!tpu.dma_semaphore, #tpu.memory_space<semaphore_mem>>
    tpu.enqueue_dma source(%26 : memref<1x128xf32, #tpu.memory_space<any>>) target(%27 : memref<1x128xf32, #tpu.memory_space<vmem>>) target_semaphore(%29 : memref<!tpu.dma_semaphore, #tpu.memory_space<semaphore_mem>>)
    %c6 = arith.constant 6 : index
    %30 = memref.load %arg0[%c6] : memref<8xi32, #tpu.memory_space<smem>>
    %c6_i32 = arith.constant 6 : i32
    %c0_i32_18 = arith.constant 0 : i32
    %31 = tpu.memref_slice %arg1[%30, %c0_i32_18] : memref<128x128xf32, #tpu.memory_space<any>> -> memref<1x128xf32, #tpu.memory_space<any>>
    %c6_i32_19 = arith.constant 6 : i32
    %c0_i32_20 = arith.constant 0 : i32
    %32 = tpu.memref_slice %arg9[%c6_i32_19, %c0_i32_20] : memref<8x128xf32, #tpu.memory_space<vmem>> -> memref<1x128xf32, #tpu.memory_space<vmem>>
    %33 = tpu.memref_slice %arg10[%c6_i32] : memref<8x!tpu.dma_semaphore, #tpu.memory_space<semaphore_mem>> -> memref<1x!tpu.dma_semaphore, #tpu.memory_space<semaphore_mem>>
    %34 = tpu.memref_squeeze %33 : memref<1x!tpu.dma_semaphore, #tpu.memory_space<semaphore_mem>> -> memref<!tpu.dma_semaphore, #tpu.memory_space<semaphore_mem>>
    tpu.enqueue_dma source(%31 : memref<1x128xf32, #tpu.memory_space<any>>) target(%32 : memref<1x128xf32, #tpu.memory_space<vmem>>) target_semaphore(%34 : memref<!tpu.dma_semaphore, #tpu.memory_space<semaphore_mem>>)
    %c7 = arith.constant 7 : index
    %35 = memref.load %arg0[%c7] : memref<8xi32, #tpu.memory_space<smem>>
    %c7_i32 = arith.constant 7 : i32
    %c0_i32_21 = arith.constant 0 : i32
    %36 = tpu.memref_slice %arg1[%35, %c0_i32_21] : memref<128x128xf32, #tpu.memory_space<any>> -> memref<1x128xf32, #tpu.memory_space<any>>
    %c7_i32_22 = arith.constant 7 : i32
    %c0_i32_23 = arith.constant 0 : i32
    %37 = tpu.memref_slice %arg9[%c7_i32_22, %c0_i32_23] : memref<8x128xf32, #tpu.memory_space<vmem>> -> memref<1x128xf32, #tpu.memory_space<vmem>>
    %38 = tpu.memref_slice %arg10[%c7_i32] : memref<8x!tpu.dma_semaphore, #tpu.memory_space<semaphore_mem>> -> memref<1x!tpu.dma_semaphore, #tpu.memory_space<semaphore_mem>>
    %39 = tpu.memref_squeeze %38 : memref<1x!tpu.dma_semaphore, #tpu.memory_space<semaphore_mem>> -> memref<!tpu.dma_semaphore, #tpu.memory_space<semaphore_mem>>
    tpu.enqueue_dma source(%36 : memref<1x128xf32, #tpu.memory_space<any>>) target(%37 : memref<1x128xf32, #tpu.memory_space<vmem>>) target_semaphore(%39 : memref<!tpu.dma_semaphore, #tpu.memory_space<semaphore_mem>>)
    %c0_24 = arith.constant 0 : index
    %40 = memref.load %arg0[%c0_24] : memref<8xi32, #tpu.memory_space<smem>>
    %c0_i32_25 = arith.constant 0 : i32
    %c0_i32_26 = arith.constant 0 : i32
    %41 = tpu.memref_slice %arg1[%40, %c0_i32_26] : memref<128x128xf32, #tpu.memory_space<any>> -> memref<1x128xf32, #tpu.memory_space<any>>
    %c0_i32_27 = arith.constant 0 : i32
    %c0_i32_28 = arith.constant 0 : i32
    %42 = tpu.memref_slice %arg9[%c0_i32_27, %c0_i32_28] : memref<8x128xf32, #tpu.memory_space<vmem>> -> memref<1x128xf32, #tpu.memory_space<vmem>>
    %43 = tpu.memref_slice %arg10[%c0_i32_25] : memref<8x!tpu.dma_semaphore, #tpu.memory_space<semaphore_mem>> -> memref<1x!tpu.dma_semaphore, #tpu.memory_space<semaphore_mem>>
    %44 = tpu.memref_squeeze %43 : memref<1x!tpu.dma_semaphore, #tpu.memory_space<semaphore_mem>> -> memref<!tpu.dma_semaphore, #tpu.memory_space<semaphore_mem>>
    tpu.wait_dma2 semaphore(%44 : memref<!tpu.dma_semaphore, #tpu.memory_space<semaphore_mem>>) src(%41 : memref<1x128xf32, #tpu.memory_space<any>>) dst(%42 : memref<1x128xf32, #tpu.memory_space<vmem>>)
    %c1_29 = arith.constant 1 : index
    %45 = memref.load %arg0[%c1_29] : memref<8xi32, #tpu.memory_space<smem>>
    %c1_i32_30 = arith.constant 1 : i32
    %c0_i32_31 = arith.constant 0 : i32
    %46 = tpu.memref_slice %arg1[%45, %c0_i32_31] : memref<128x128xf32, #tpu.memory_space<any>> -> memref<1x128xf32, #tpu.memory_space<any>>
    %c1_i32_32 = arith.constant 1 : i32
    %c0_i32_33 = arith.constant 0 : i32
    %47 = tpu.memref_slice %arg9[%c1_i32_32, %c0_i32_33] : memref<8x128xf32, #tpu.memory_space<vmem>> -> memref<1x128xf32, #tpu.memory_space<vmem>>
    %48 = tpu.memref_slice %arg10[%c1_i32_30] : memref<8x!tpu.dma_semaphore, #tpu.memory_space<semaphore_mem>> -> memref<1x!tpu.dma_semaphore, #tpu.memory_space<semaphore_mem>>
    %49 = tpu.memref_squeeze %48 : memref<1x!tpu.dma_semaphore, #tpu.memory_space<semaphore_mem>> -> memref<!tpu.dma_semaphore, #tpu.memory_space<semaphore_mem>>
    tpu.wait_dma2 semaphore(%49 : memref<!tpu.dma_semaphore, #tpu.memory_space<semaphore_mem>>) src(%46 : memref<1x128xf32, #tpu.memory_space<any>>) dst(%47 : memref<1x128xf32, #tpu.memory_space<vmem>>)
    %c2_34 = arith.constant 2 : index
    %50 = memref.load %arg0[%c2_34] : memref<8xi32, #tpu.memory_space<smem>>
    %c2_i32_35 = arith.constant 2 : i32
    %c0_i32_36 = arith.constant 0 : i32
    %51 = tpu.memref_slice %arg1[%50, %c0_i32_36] : memref<128x128xf32, #tpu.memory_space<any>> -> memref<1x128xf32, #tpu.memory_space<any>>
    %c2_i32_37 = arith.constant 2 : i32
    %c0_i32_38 = arith.constant 0 : i32
    %52 = tpu.memref_slice %arg9[%c2_i32_37, %c0_i32_38] : memref<8x128xf32, #tpu.memory_space<vmem>> -> memref<1x128xf32, #tpu.memory_space<vmem>>
    %53 = tpu.memref_slice %arg10[%c2_i32_35] : memref<8x!tpu.dma_semaphore, #tpu.memory_space<semaphore_mem>> -> memref<1x!tpu.dma_semaphore, #tpu.memory_space<semaphore_mem>>
    %54 = tpu.memref_squeeze %53 : memref<1x!tpu.dma_semaphore, #tpu.memory_space<semaphore_mem>> -> memref<!tpu.dma_semaphore, #tpu.memory_space<semaphore_mem>>
    tpu.wait_dma2 semaphore(%54 : memref<!tpu.dma_semaphore, #tpu.memory_space<semaphore_mem>>) src(%51 : memref<1x128xf32, #tpu.memory_space<any>>) dst(%52 : memref<1x128xf32, #tpu.memory_space<vmem>>)
    %c3_39 = arith.constant 3 : index
    %55 = memref.load %arg0[%c3_39] : memref<8xi32, #tpu.memory_space<smem>>
    %c3_i32_40 = arith.constant 3 : i32
    %c0_i32_41 = arith.constant 0 : i32
    %56 = tpu.memref_slice %arg1[%55, %c0_i32_41] : memref<128x128xf32, #tpu.memory_space<any>> -> memref<1x128xf32, #tpu.memory_space<any>>
    %c3_i32_42 = arith.constant 3 : i32
    %c0_i32_43 = arith.constant 0 : i32
    %57 = tpu.memref_slice %arg9[%c3_i32_42, %c0_i32_43] : memref<8x128xf32, #tpu.memory_space<vmem>> -> memref<1x128xf32, #tpu.memory_space<vmem>>
    %58 = tpu.memref_slice %arg10[%c3_i32_40] : memref<8x!tpu.dma_semaphore, #tpu.memory_space<semaphore_mem>> -> memref<1x!tpu.dma_semaphore, #tpu.memory_space<semaphore_mem>>
    %59 = tpu.memref_squeeze %58 : memref<1x!tpu.dma_semaphore, #tpu.memory_space<semaphore_mem>> -> memref<!tpu.dma_semaphore, #tpu.memory_space<semaphore_mem>>
    tpu.wait_dma2 semaphore(%59 : memref<!tpu.dma_semaphore, #tpu.memory_space<semaphore_mem>>) src(%56 : memref<1x128xf32, #tpu.memory_space<any>>) dst(%57 : memref<1x128xf32, #tpu.memory_space<vmem>>)
    %c4_44 = arith.constant 4 : index
    %60 = memref.load %arg0[%c4_44] : memref<8xi32, #tpu.memory_space<smem>>
    %c4_i32_45 = arith.constant 4 : i32
    %c0_i32_46 = arith.constant 0 : i32
    %61 = tpu.memref_slice %arg1[%60, %c0_i32_46] : memref<128x128xf32, #tpu.memory_space<any>> -> memref<1x128xf32, #tpu.memory_space<any>>
    %c4_i32_47 = arith.constant 4 : i32
    %c0_i32_48 = arith.constant 0 : i32
    %62 = tpu.memref_slice %arg9[%c4_i32_47, %c0_i32_48] : memref<8x128xf32, #tpu.memory_space<vmem>> -> memref<1x128xf32, #tpu.memory_space<vmem>>
    %63 = tpu.memref_slice %arg10[%c4_i32_45] : memref<8x!tpu.dma_semaphore, #tpu.memory_space<semaphore_mem>> -> memref<1x!tpu.dma_semaphore, #tpu.memory_space<semaphore_mem>>
    %64 = tpu.memref_squeeze %63 : memref<1x!tpu.dma_semaphore, #tpu.memory_space<semaphore_mem>> -> memref<!tpu.dma_semaphore, #tpu.memory_space<semaphore_mem>>
    tpu.wait_dma2 semaphore(%64 : memref<!tpu.dma_semaphore, #tpu.memory_space<semaphore_mem>>) src(%61 : memref<1x128xf32, #tpu.memory_space<any>>) dst(%62 : memref<1x128xf32, #tpu.memory_space<vmem>>)
    %c5_49 = arith.constant 5 : index
    %65 = memref.load %arg0[%c5_49] : memref<8xi32, #tpu.memory_space<smem>>
    %c5_i32_50 = arith.constant 5 : i32
    %c0_i32_51 = arith.constant 0 : i32
    %66 = tpu.memref_slice %arg1[%65, %c0_i32_51] : memref<128x128xf32, #tpu.memory_space<any>> -> memref<1x128xf32, #tpu.memory_space<any>>
    %c5_i32_52 = arith.constant 5 : i32
    %c0_i32_53 = arith.constant 0 : i32
    %67 = tpu.memref_slice %arg9[%c5_i32_52, %c0_i32_53] : memref<8x128xf32, #tpu.memory_space<vmem>> -> memref<1x128xf32, #tpu.memory_space<vmem>>
    %68 = tpu.memref_slice %arg10[%c5_i32_50] : memref<8x!tpu.dma_semaphore, #tpu.memory_space<semaphore_mem>> -> memref<1x!tpu.dma_semaphore, #tpu.memory_space<semaphore_mem>>
    %69 = tpu.memref_squeeze %68 : memref<1x!tpu.dma_semaphore, #tpu.memory_space<semaphore_mem>> -> memref<!tpu.dma_semaphore, #tpu.memory_space<semaphore_mem>>
    tpu.wait_dma2 semaphore(%69 : memref<!tpu.dma_semaphore, #tpu.memory_space<semaphore_mem>>) src(%66 : memref<1x128xf32, #tpu.memory_space<any>>) dst(%67 : memref<1x128xf32, #tpu.memory_space<vmem>>)
    %c6_54 = arith.constant 6 : index
    %70 = memref.load %arg0[%c6_54] : memref<8xi32, #tpu.memory_space<smem>>
    %c6_i32_55 = arith.constant 6 : i32
    %c0_i32_56 = arith.constant 0 : i32
    %71 = tpu.memref_slice %arg1[%70, %c0_i32_56] : memref<128x128xf32, #tpu.memory_space<any>> -> memref<1x128xf32, #tpu.memory_space<any>>
    %c6_i32_57 = arith.constant 6 : i32
    %c0_i32_58 = arith.constant 0 : i32
    %72 = tpu.memref_slice %arg9[%c6_i32_57, %c0_i32_58] : memref<8x128xf32, #tpu.memory_space<vmem>> -> memref<1x128xf32, #tpu.memory_space<vmem>>
    %73 = tpu.memref_slice %arg10[%c6_i32_55] : memref<8x!tpu.dma_semaphore, #tpu.memory_space<semaphore_mem>> -> memref<1x!tpu.dma_semaphore, #tpu.memory_space<semaphore_mem>>
    %74 = tpu.memref_squeeze %73 : memref<1x!tpu.dma_semaphore, #tpu.memory_space<semaphore_mem>> -> memref<!tpu.dma_semaphore, #tpu.memory_space<semaphore_mem>>
    tpu.wait_dma2 semaphore(%74 : memref<!tpu.dma_semaphore, #tpu.memory_space<semaphore_mem>>) src(%71 : memref<1x128xf32, #tpu.memory_space<any>>) dst(%72 : memref<1x128xf32, #tpu.memory_space<vmem>>)
    %c7_59 = arith.constant 7 : index
    %75 = memref.load %arg0[%c7_59] : memref<8xi32, #tpu.memory_space<smem>>
    %c7_i32_60 = arith.constant 7 : i32
    %c0_i32_61 = arith.constant 0 : i32
    %76 = tpu.memref_slice %arg1[%75, %c0_i32_61] : memref<128x128xf32, #tpu.memory_space<any>> -> memref<1x128xf32, #tpu.memory_space<any>>
    %c7_i32_62 = arith.constant 7 : i32
    %c0_i32_63 = arith.constant 0 : i32
    %77 = tpu.memref_slice %arg9[%c7_i32_62, %c0_i32_63] : memref<8x128xf32, #tpu.memory_space<vmem>> -> memref<1x128xf32, #tpu.memory_space<vmem>>
    %78 = tpu.memref_slice %arg10[%c7_i32_60] : memref<8x!tpu.dma_semaphore, #tpu.memory_space<semaphore_mem>> -> memref<1x!tpu.dma_semaphore, #tpu.memory_space<semaphore_mem>>
    %79 = tpu.memref_squeeze %78 : memref<1x!tpu.dma_semaphore, #tpu.memory_space<semaphore_mem>> -> memref<!tpu.dma_semaphore, #tpu.memory_space<semaphore_mem>>
    tpu.wait_dma2 semaphore(%79 : memref<!tpu.dma_semaphore, #tpu.memory_space<semaphore_mem>>) src(%76 : memref<1x128xf32, #tpu.memory_space<any>>) dst(%77 : memref<1x128xf32, #tpu.memory_space<vmem>>)
    %c0_64 = arith.constant 0 : index
    %c0_65 = arith.constant 0 : index
    %80 = vector.load %arg9[%c0_64, %c0_65] : memref<8x128xf32, #tpu.memory_space<vmem>>, vector<8x128xf32>
    %81 = arith.truncf %80 : vector<8x128xf32> to vector<8x128xbf16>
    %c0_66 = arith.constant 0 : index
    %c0_67 = arith.constant 0 : index
    %82 = vector.load %arg2[%c0_66, %c0_67] : memref<128x128xbf16, #tpu.memory_space<vmem>>, vector<128x128xbf16>
    %cst = arith.constant dense<0.000000e+00> : vector<8x128xf32>
    %83 = tpu.matmul %81, %82, %cst {dimension_numbers = #tpu.dot_dimension_numbers<[1], [0], [0], [1], [0, 0, 1, 1], [], []>} : vector<8x128xbf16>, vector<128x128xbf16>, vector<8x128xf32> -> vector<8x128xf32>
    %c0_68 = arith.constant 0 : index
    %c0_69 = arith.constant 0 : index
    %84 = vector.load %arg3[%c0_68, %c0_69] : memref<1x128xf32, #tpu.memory_space<vmem>>, vector<1x128xf32>
    %85 = vector.broadcast %84 : vector<1x128xf32> to vector<8x128xf32>
    %86 = arith.addf %83, %85 : vector<8x128xf32>
    %87 = math.tanh %86 : vector<8x128xf32>
    %c0_70 = arith.constant 0 : index
    %c0_71 = arith.constant 0 : index
    %88 = vector.load %arg4[%c0_70, %c0_71] : memref<1x128xf32, #tpu.memory_space<vmem>>, vector<1x128xf32>
    %89 = vector.broadcast %88 : vector<1x128xf32> to vector<8x128xf32>
    %90 = arith.mulf %87, %89 : vector<8x128xf32>
    %cst_72 = arith.constant dense<0.000000e+00> : vector<8xf32>
    %91 = vector.multi_reduction <add>, %90, %cst_72 [1] : vector<8x128xf32> to vector<8xf32>
    %92 = vector.shape_cast %91 : vector<8xf32> to vector<8x1xf32>
    %c0_73 = arith.constant 0 : index
    %93 = memref.load %arg5[%c0_73] : memref<1xf32, #tpu.memory_space<smem>>
    %94 = vector.broadcast %93 : f32 to vector<8x1xf32>
    %95 = arith.addf %92, %94 : vector<8x1xf32>
    %cst_74 = arith.constant 0.000000e+00 : f32
    %96 = vector.broadcast %cst_74 : f32 to vector<8x1xf32>
    %97 = arith.subf %96, %95 : vector<8x1xf32>
    %98 = math.exp %97 : vector<8x1xf32>
    %cst_75 = arith.constant 1.000000e+00 : f32
    %99 = vector.broadcast %cst_75 : f32 to vector<8x1xf32>
    %100 = arith.addf %99, %98 : vector<8x1xf32>
    %cst_76 = arith.constant 1.000000e+00 : f32
    %101 = vector.broadcast %cst_76 : f32 to vector<8x1xf32>
    %102 = arith.divf %101, %100 : vector<8x1xf32>
    %c0_77 = arith.constant 0 : index
    %c0_78 = arith.constant 0 : index
    %103 = vector.load %arg6[%c0_77, %c0_78] : memref<8x1xf32, #tpu.memory_space<vmem>>, vector<8x1xf32>
    %cst_79 = arith.constant 1.000000e-10 : f32
    %104 = vector.broadcast %cst_79 : f32 to vector<8x1xf32>
    %105 = arith.addf %102, %104 : vector<8x1xf32>
    %106 = math.log %105 : vector<8x1xf32>
    %107 = arith.mulf %106, %103 : vector<8x1xf32>
    %cst_80 = arith.constant 1.000000e+00 : f32
    %108 = vector.broadcast %cst_80 : f32 to vector<8x1xf32>
    %109 = arith.subf %108, %102 : vector<8x1xf32>
    %cst_81 = arith.constant 1.000000e-10 : f32
    %110 = vector.broadcast %cst_81 : f32 to vector<8x1xf32>
    %111 = arith.addf %109, %110 : vector<8x1xf32>
    %112 = math.log %111 : vector<8x1xf32>
    %cst_82 = arith.constant 1.000000e+00 : f32
    %113 = vector.broadcast %cst_82 : f32 to vector<8x1xf32>
    %114 = arith.subf %113, %103 : vector<8x1xf32>
    %115 = arith.mulf %112, %114 : vector<8x1xf32>
    %116 = arith.addf %107, %115 : vector<8x1xf32>
    %cst_83 = arith.constant dense<0.000000e+00> : vector<1xf32>
    %117 = vector.multi_reduction <add>, %116, %cst_83 [0] : vector<8x1xf32> to vector<1xf32>
    %118 = vector.shape_cast %117 : vector<1xf32> to vector<1x1xf32>
    %cst_84 = arith.constant 0.000000e+00 : f32
    %119 = vector.broadcast %cst_84 : f32 to vector<1x1xf32>
    %120 = arith.subf %119, %118 : vector<1x1xf32>
    %cst_85 = arith.constant 1.250000e-01 : f32
    %121 = vector.broadcast %cst_85 : f32 to vector<1x1xf32>
    %122 = arith.mulf %120, %121 : vector<1x1xf32>
    %123 = vector.shape_cast %102 : vector<8x1xf32> to vector<8x1xf32>
    %124 = vector.broadcast %123 : vector<8x1xf32> to vector<8x128xf32>
    %c0_86 = arith.constant 0 : index
    %c0_87 = arith.constant 0 : index
    %125 = vector.load %arg7[%c0_86, %c0_87] : memref<8x128xf32, #tpu.memory_space<vmem>>, vector<8x128xf32>
    tpu.vector_store %arg7[%c0_86, %c0_87], %124 {strides = array<i32>} : memref<8x128xf32, #tpu.memory_space<vmem>>, vector<8x128xf32>,
    %126 = vector.shape_cast %122 : vector<1x1xf32> to vector<1x1xf32>
    %127 = vector.broadcast %126 : vector<1x1xf32> to vector<1x128xf32>
    %c0_88 = arith.constant 0 : index
    %c0_89 = arith.constant 0 : index
    %128 = vector.load %arg8[%c0_88, %c0_89] : memref<1x128xf32, #tpu.memory_space<vmem>>, vector<1x128xf32>
    tpu.vector_store %arg8[%c0_88, %c0_89], %127 {strides = array<i32>} : memref<1x128xf32, #tpu.memory_space<vmem>>, vector<1x128xf32>,
    return
  }
}

</mosaic_0001>

<llo_original>
// kernel: model_forward.1
$region0: #{model_forward.1}
  #allocation0 [shape = 'u32[]', space=smem, size = 0x4, offset = 0x4, fixed_abs, tag = 'smem constant byte address 0x4 - core index']
  #allocation1 [shape = 'u32[144,128]{1,0:T(1,128)}', space=vmem, size = 0x12000, scoped, tag = 'internal scratch']
  #allocation2 [shape = 'f32[8,128]{1,0:T(8,128)}', space=vmem, size = 0x1000, scoped, tag = 'scratch operand']
  #allocation3 [shape = 's32[8]{0}', space=sflag, size = 0x20, scoped, tag = 'scratch operand']
  #allocation4 [shape = 'f32[1]{0:T(128)S(6)}', space=smem, size = 0x200, scoped, tag = 'scoped memory for model_forward.1']
  #allocation9 [shape = 's32[]', space=sflag, size = 0x4, offset = 0, fixed_abs, tag = 'sflag constant byte address 0x0 - dummy sync flag']
  #allocation10 [shape = 's32[]', space=sflag, size = 0x4, offset = 0, fixed_abs, tag = 'sflag constant byte address 0x0 - dummy sync flag']
  #allocation11 [shape = 's32[]', space=sflag, size = 0x4, offset = 0, fixed_abs, tag = 'sflag constant byte address 0x0 - dummy sync flag']
  #allocation12 [shape = 's32[]', space=sflag, size = 0x4, offset = 0, fixed_abs, tag = 'sflag constant byte address 0x0 - dummy sync flag']
  #allocation13 [shape = 's32[]', space=sflag, size = 0x4, offset = 0, fixed_abs, tag = 'sflag constant byte address 0x0 - dummy sync flag']
  #allocation14 [shape = 's32[]', space=sflag, size = 0x4, offset = 0, fixed_abs, tag = 'sflag constant byte address 0x0 - dummy sync flag']
  #allocation15 [shape = 's32[]', space=sflag, size = 0x4, offset = 0, fixed_abs, tag = 'sflag constant byte address 0x0 - dummy sync flag']
  #allocation16 [shape = 's32[]', space=sflag, size = 0x4, offset = 0, fixed_abs, tag = 'sflag constant byte address 0x0 - dummy sync flag']
  %s0 = inlined_call_operand.vmem [shape: s32[8], index: 0, kind: input, shape index: {}]
  %s1 = inlined_call_operand.vmem [shape: f32[128,128], index: 1, kind: input, shape index: {}]
  %s2 = inlined_call_operand.vmem [shape: bf16[128,128], index: 2, kind: input, shape index: {}]
  %s3 = inlined_call_operand.vmem [shape: f32[1,128], index: 3, kind: input, shape index: {}]
  %s4 = inlined_call_operand.vmem [shape: f32[1,128], index: 4, kind: input, shape index: {}]
  %s5 = inlined_call_operand.<no memory space> [shape: f32[1], index: 5, kind: input, shape index: {}]
  %s6 = inlined_call_operand.vmem [shape: f32[8,1], index: 6, kind: input, shape index: {}]
  %s7 = inlined_call_operand.vmem [shape: f32[8,128], index: 7, kind: output, shape index: {0}]
  %s8 = inlined_call_operand.hbm [shape: f32[1,128], index: 8, kind: output, shape index: {1}]
  %9 = xla_tuple %s7, %s8
  %s10 = sld [smem:[#allocation0]]
  $region286: #{model_forward.1} parent=0
    _
  %s12 = ssub.s32 1, %s10
  %s13 = scalar_select 0, %s12, %s10
  %14 = sst [smem:[#allocation4]] %s5
  $region1: #{model_forward.1} parent=0
    #allocation5 [shape = 'u8[512]{0}', space=smem, size = 0x200, scoped, tag = 'input window, operand 0, single buffered']
    #allocation6 [shape = 's32[1]{0}', space=sflag, size = 0x4, scoped, tag = 'scoped memory for model_forward.1']
    #allocation7 [shape = 's32[1]{0}', space=sflag, size = 0x4, scoped, tag = 'scoped memory for model_forward.1']
    #allocation8 [shape = 'u8[512]{0}', space=vmem, size = 0x400, scoped, tag = 'output window, operand 1, single buffered']
    %15 = vsyncpa [#allocation7], 0
    %16 = vsyncpa [#allocation6], 0
    // Predicated region
    $region2: #{model_forward.1} parent=1 // pred_check
      _
    $region3: #{model_forward.1} parent=1 // pred_check_branch
      %18 = sbr.rel (0) target = $region5
    $region4: #{model_forward.1} parent=1 // pred_region
      %s20 = ssub.s32 16, 16
      %21 = vsyncadd [#allocation7], %s20
      %s23 = sshll.u32 %s0, 4
      %s24 = int_to_ptr.vmem [resolvable:$true] %s23
      %26 = dma.vmem_to_smem %s24, 16, [#allocation5], [#allocation7]
    $region5: #{model_forward.1} parent=1 // pred_fallthru
      _
    // Predicated region
    $region6: #{model_forward.1} parent=1 // pred_check
      _
    $region7: #{model_forward.1} parent=1 // pred_check_branch
      %28 = sbr.rel (0) target = $region9
    $region8: #{model_forward.1} parent=1 // pred_region
      _
    $region9: #{model_forward.1} parent=1 // pred_fallthru
      _
    // Predicated region
    $region10: #{model_forward.1} parent=1 // pred_check
      _
    $region11: #{model_forward.1} parent=1 // pred_check_branch
      %30 = sbr.rel (0) target = $region13
    $region12: #{model_forward.1} parent=1 // pred_region
      _
    $region13: #{model_forward.1} parent=1 // pred_fallthru
      _
    // Predicated region
    $region14: #{model_forward.1} parent=1 // pred_check
      _
    $region15: #{model_forward.1} parent=1 // pred_check_branch
      %32 = sbr.rel (0) target = $region17
    $region16: #{model_forward.1} parent=1 // pred_region
      _
    $region17: #{model_forward.1} parent=1 // pred_fallthru
      _
    // Predicated region
    $region18: #{model_forward.1} parent=1 // pred_check
      _
    $region19: #{model_forward.1} parent=1 // pred_check_branch
      %34 = sbr.rel (0) target = $region21
    $region20: #{model_forward.1} parent=1 // pred_region
      _
    $region21: #{model_forward.1} parent=1 // pred_fallthru
      _
    // Predicated region
    $region22: #{model_forward.1} parent=1 // pred_check
      _
    $region23: #{model_forward.1} parent=1 // pred_check_branch
      %36 = sbr.rel (0) target = $region25
    $region24: #{model_forward.1} parent=1 // pred_region
      _
    $region25: #{model_forward.1} parent=1 // pred_fallthru
      _
    // Predicated region
    $region26: #{model_forward.1} parent=1 // pred_check
      _
    $region27: #{model_forward.1} parent=1 // pred_check_branch
      %38 = sbr.rel (0) target = $region29
    $region28: #{model_forward.1} parent=1 // pred_region
      %39 = dma.done [#allocation7], 16
    $region29: #{model_forward.1} parent=1 // pred_fallthru
      _
    %40 = sfence
    %s42 = sld [smem:[#allocation5]]
    %s43 = scalar_lea.vmem %s1, %s42
    %p45 = scmp.lt.u32.totalorder 1, 8
    %p46 = pneg %p45
    // Predicated region
    $region30: #{model_forward.1} parent=1 // pred_check
      _
    $region31: #{model_forward.1} parent=1 // pred_check_branch
      %48 = sbr.rel (%p45) target = $region33
    $region32: #{model_forward.1} parent=1 // pred_region
      %s64 = sand.u32 1, 7
      %p65 = scmp.eq.s32.totalorder %s64, 0
      %p66 = pneg %p65
      // Predicated region
      $region45: #{model_forward.1} parent=32 // pred_check
        _
      $region46: #{model_forward.1} parent=32 // pred_check_branch
        %68 = sbr.rel (%p65) target = $region48
      $region47: #{model_forward.1} parent=32 // pred_region
        %s69 = sand.u32 1, 7
        %s70 = ssub.s32 1, %s69
        %s71 = scalar_lea.vmem %s43, %s70
        %s72 = ssub.s32 1, %s69
        %s73 = scalar_lea.vmem [#allocation2], %s72
        %s74 = sshll.u32 1, %s69
        %s75 = ssub.s32 %s74, 1
        loop: start=0, step=1, limit=1
        $region49: #{model_forward.1} parent=47 // loop_pre_header
          _
        $region50: #{model_forward.1} parent=47 // loop_header
          %s77 = sphi 0, %s81
          %p78 = scmp.ge.s32.totalorder %s77, 1
          %s82 = sphi %s71, %s71
          %s83 = sphi %s73, %s73
        $region51: #{model_forward.1} parent=47 // loop_header_branch
          %80 = sbr.rel (%p78) target = $region55
        $region52: #{model_forward.1} parent=47 // loop_body
          %v84 = vld [vmem:[%s82] sm:%s75]
          %85 = vst [vmem:[%s83] sm:%s75] %v84
        $region53: #{model_forward.1} parent=47 // loop_footer
          %s81 = sadd.s32 1, %s77
        $region54: #{model_forward.1} parent=47 // loop_footer_branch
          %76 = sbr.rel target = $region50
        $region55: #{model_forward.1} parent=47 // loop_exit
          _
      $region48: #{model_forward.1} parent=32 // pred_fallthru
        _
    $region33: #{model_forward.1} parent=1 // pred_fallthru
      _
    // Predicated region
    $region34: #{model_forward.1} parent=1 // pred_check
      %p49 = pneg %p45
    $region35: #{model_forward.1} parent=1 // pred_check_branch
      %51 = sbr.rel (%p49) target = $region37
    $region36: #{model_forward.1} parent=1 // pred_region
      %s52 = sshll.u32 1, 1
      %s53 = ssub.s32 %s52, 1
      loop: start=0, step=1, limit=1
      $region38: #{model_forward.1} parent=36 // loop_pre_header
        _
      $region39: #{model_forward.1} parent=36 // loop_header
        %s55 = sphi 0, %s59
        %p56 = scmp.ge.s32.totalorder %s55, 1
        %s60 = sphi %s43, %s43
        %s61 = sphi [#allocation2], [#allocation2]
      $region40: #{model_forward.1} parent=36 // loop_header_branch
        %58 = sbr.rel (%p56) target = $region44
      $region41: #{model_forward.1} parent=36 // loop_body
        %v62 = vld [vmem:[%s60] sm:%s53]
        %63 = vst [vmem:[%s61] sm:%s53] %v62
      $region42: #{model_forward.1} parent=36 // loop_footer
        %s59 = sadd.s32 1, %s55
      $region43: #{model_forward.1} parent=36 // loop_footer_branch
        %54 = sbr.rel target = $region39
      $region44: #{model_forward.1} parent=36 // loop_exit
        _
    $region37: #{model_forward.1} parent=1 // pred_fallthru
      _
    // Predicated region
    $region56: #{model_forward.1} parent=1 // pred_check
      _
    $region57: #{model_forward.1} parent=1 // pred_check_branch
      %88 = sbr.rel (0) target = $region59
    $region58: #{model_forward.1} parent=1 // pred_region
      %89 = vsyncadd [#allocation3], 16
    $region59: #{model_forward.1} parent=1 // pred_fallthru
      _
    %s90 = sld [smem:[#allocation5 + $0x1]]
    %s91 = scalar_lea.vmem %s1, %s90
    %s92 = scalar_lea.vmem [#allocation2], 1
    %s93 = scalar_lea.sflag [#allocation3], 1
    %p95 = scmp.lt.u32.totalorder 1, 8
    %p96 = pneg %p95
    // Predicated region
    $region60: #{model_forward.1} parent=1 // pred_check
      _
    $region61: #{model_forward.1} parent=1 // pred_check_branch
      %98 = sbr.rel (%p95) target = $region63
    $region62: #{model_forward.1} parent=1 // pred_region
      %s114 = sand.u32 1, 7
      %p115 = scmp.eq.s32.totalorder %s114, 0
      %p116 = pneg %p115
      // Predicated region
      $region75: #{model_forward.1} parent=62 // pred_check
        _
      $region76: #{model_forward.1} parent=62 // pred_check_branch
        %118 = sbr.rel (%p115) target = $region78
      $region77: #{model_forward.1} parent=62 // pred_region
        %s119 = sand.u32 1, 7
        %s120 = ssub.s32 1, %s119
        %s121 = scalar_lea.vmem %s91, %s120
        %s122 = ssub.s32 1, %s119
        %s123 = scalar_lea.vmem %s92, %s122 [#allocation2]
        %s124 = sshll.u32 1, %s119
        %s125 = ssub.s32 %s124, 1
        loop: start=0, step=1, limit=1
        $region79: #{model_forward.1} parent=77 // loop_pre_header
          _
        $region80: #{model_forward.1} parent=77 // loop_header
          %s127 = sphi 0, %s131
          %p128 = scmp.ge.s32.totalorder %s127, 1
          %s132 = sphi %s121, %s121
          %s133 = sphi %s123, %s123
        $region81: #{model_forward.1} parent=77 // loop_header_branch
          %130 = sbr.rel (%p128) target = $region85
        $region82: #{model_forward.1} parent=77 // loop_body
          %v134 = vld [vmem:[%s132] sm:%s125]
          %135 = vst [vmem:[%s133] sm:%s125] %v134
        $region83: #{model_forward.1} parent=77 // loop_footer
          %s131 = sadd.s32 1, %s127
        $region84: #{model_forward.1} parent=77 // loop_footer_branch
          %126 = sbr.rel target = $region80
        $region85: #{model_forward.1} parent=77 // loop_exit
          _
      $region78: #{model_forward.1} parent=62 // pred_fallthru
        _
    $region63: #{model_forward.1} parent=1 // pred_fallthru
      _
    // Predicated region
    $region64: #{model_forward.1} parent=1 // pred_check
      %p99 = pneg %p95
    $region65: #{model_forward.1} parent=1 // pred_check_branch
      %101 = sbr.rel (%p99) target = $region67
    $region66: #{model_forward.1} parent=1 // pred_region
      %s102 = sshll.u32 1, 1
      %s103 = ssub.s32 %s102, 1
      loop: start=0, step=1, limit=1
      $region68: #{model_forward.1} parent=66 // loop_pre_header
        _
      $region69: #{model_forward.1} parent=66 // loop_header
        %s105 = sphi 0, %s109
        %p106 = scmp.ge.s32.totalorder %s105, 1
        %s110 = sphi %s91, %s91
        %s111 = sphi %s92, %s92
      $region70: #{model_forward.1} parent=66 // loop_header_branch
        %108 = sbr.rel (%p106) target = $region74
      $region71: #{model_forward.1} parent=66 // loop_body
        %v112 = vld [vmem:[%s110] sm:%s103]
        %113 = vst [vmem:[%s111] sm:%s103] %v112
      $region72: #{model_forward.1} parent=66 // loop_footer
        %s109 = sadd.s32 1, %s105
      $region73: #{model_forward.1} parent=66 // loop_footer_branch
        %104 = sbr.rel target = $region69
      $region74: #{model_forward.1} parent=66 // loop_exit
        _
    $region67: #{model_forward.1} parent=1 // pred_fallthru
      _
    // Predicated region
    $region86: #{model_forward.1} parent=1 // pred_check
      _
    $region87: #{model_forward.1} parent=1 // pred_check_branch
      %138 = sbr.rel (0) target = $region89
    $region88: #{model_forward.1} parent=1 // pred_region
      %139 = vsyncadd %s93, 16
    $region89: #{model_forward.1} parent=1 // pred_fallthru
      _
    %s140 = sld [smem:[#allocation5 + $0x2]]
    %s141 = scalar_lea.vmem %s1, %s140
    %s142 = scalar_lea.vmem [#allocation2], 2
    %s143 = scalar_lea.sflag [#allocation3], 2
    %p145 = scmp.lt.u32.totalorder 1, 8
    %p146 = pneg %p145
    // Predicated region
    $region90: #{model_forward.1} parent=1 // pred_check
      _
    $region91: #{model_forward.1} parent=1 // pred_check_branch
      %148 = sbr.rel (%p145) target = $region93
    $region92: #{model_forward.1} parent=1 // pred_region
      %s164 = sand.u32 1, 7
      %p165 = scmp.eq.s32.totalorder %s164, 0
      %p166 = pneg %p165
      // Predicated region
      $region105: #{model_forward.1} parent=92 // pred_check
        _
      $region106: #{model_forward.1} parent=92 // pred_check_branch
        %168 = sbr.rel (%p165) target = $region108
      $region107: #{model_forward.1} parent=92 // pred_region
        %s169 = sand.u32 1, 7
        %s170 = ssub.s32 1, %s169
        %s171 = scalar_lea.vmem %s141, %s170
        %s172 = ssub.s32 1, %s169
        %s173 = scalar_lea.vmem %s142, %s172 [#allocation2]
        %s174 = sshll.u32 1, %s169
        %s175 = ssub.s32 %s174, 1
        loop: start=0, step=1, limit=1
        $region109: #{model_forward.1} parent=107 // loop_pre_header
          _
        $region110: #{model_forward.1} parent=107 // loop_header
          %s177 = sphi 0, %s181
          %p178 = scmp.ge.s32.totalorder %s177, 1
          %s182 = sphi %s171, %s171
          %s183 = sphi %s173, %s173
        $region111: #{model_forward.1} parent=107 // loop_header_branch
          %180 = sbr.rel (%p178) target = $region115
        $region112: #{model_forward.1} parent=107 // loop_body
          %v184 = vld [vmem:[%s182] sm:%s175]
          %185 = vst [vmem:[%s183] sm:%s175] %v184
        $region113: #{model_forward.1} parent=107 // loop_footer
          %s181 = sadd.s32 1, %s177
        $region114: #{model_forward.1} parent=107 // loop_footer_branch
          %176 = sbr.rel target = $region110
        $region115: #{model_forward.1} parent=107 // loop_exit
          _
      $region108: #{model_forward.1} parent=92 // pred_fallthru
        _
    $region93: #{model_forward.1} parent=1 // pred_fallthru
      _
    // Predicated region
    $region94: #{model_forward.1} parent=1 // pred_check
      %p149 = pneg %p145
    $region95: #{model_forward.1} parent=1 // pred_check_branch
      %151 = sbr.rel (%p149) target = $region97
    $region96: #{model_forward.1} parent=1 // pred_region
      %s152 = sshll.u32 1, 1
      %s153 = ssub.s32 %s152, 1
      loop: start=0, step=1, limit=1
      $region98: #{model_forward.1} parent=96 // loop_pre_header
        _
      $region99: #{model_forward.1} parent=96 // loop_header
        %s155 = sphi 0, %s159
        %p156 = scmp.ge.s32.totalorder %s155, 1
        %s160 = sphi %s141, %s141
        %s161 = sphi %s142, %s142
      $region100: #{model_forward.1} parent=96 // loop_header_branch
        %158 = sbr.rel (%p156) target = $region104
      $region101: #{model_forward.1} parent=96 // loop_body
        %v162 = vld [vmem:[%s160] sm:%s153]
        %163 = vst [vmem:[%s161] sm:%s153] %v162
      $region102: #{model_forward.1} parent=96 // loop_footer
        %s159 = sadd.s32 1, %s155
      $region103: #{model_forward.1} parent=96 // loop_footer_branch
        %154 = sbr.rel target = $region99
      $region104: #{model_forward.1} parent=96 // loop_exit
        _
    $region97: #{model_forward.1} parent=1 // pred_fallthru
      _
    // Predicated region
    $region116: #{model_forward.1} parent=1 // pred_check
      _
    $region117: #{model_forward.1} parent=1 // pred_check_branch
      %188 = sbr.rel (0) target = $region119
    $region118: #{model_forward.1} parent=1 // pred_region
      %189 = vsyncadd %s143, 16
    $region119: #{model_forward.1} parent=1 // pred_fallthru
      _
    %s190 = sld [smem:[#allocation5 + $0x3]]
    %s191 = scalar_lea.vmem %s1, %s190
    %s192 = scalar_lea.vmem [#allocation2], 3
    %s193 = scalar_lea.sflag [#allocation3], 3
    %p195 = scmp.lt.u32.totalorder 1, 8
    %p196 = pneg %p195
    // Predicated region
    $region120: #{model_forward.1} parent=1 // pred_check
      _
    $region121: #{model_forward.1} parent=1 // pred_check_branch
      %198 = sbr.rel (%p195) target = $region123
    $region122: #{model_forward.1} parent=1 // pred_region
      %s214 = sand.u32 1, 7
      %p215 = scmp.eq.s32.totalorder %s214, 0
      %p216 = pneg %p215
      // Predicated region
      $region135: #{model_forward.1} parent=122 // pred_check
        _
      $region136: #{model_forward.1} parent=122 // pred_check_branch
        %218 = sbr.rel (%p215) target = $region138
      $region137: #{model_forward.1} parent=122 // pred_region
        %s219 = sand.u32 1, 7
        %s220 = ssub.s32 1, %s219
        %s221 = scalar_lea.vmem %s191, %s220
        %s222 = ssub.s32 1, %s219
        %s223 = scalar_lea.vmem %s192, %s222 [#allocation2]
        %s224 = sshll.u32 1, %s219
        %s225 = ssub.s32 %s224, 1
        loop: start=0, step=1, limit=1
        $region139: #{model_forward.1} parent=137 // loop_pre_header
          _
        $region140: #{model_forward.1} parent=137 // loop_header
          %s227 = sphi 0, %s231
          %p228 = scmp.ge.s32.totalorder %s227, 1
          %s232 = sphi %s221, %s221
          %s233 = sphi %s223, %s223
        $region141: #{model_forward.1} parent=137 // loop_header_branch
          %230 = sbr.rel (%p228) target = $region145
        $region142: #{model_forward.1} parent=137 // loop_body
          %v234 = vld [vmem:[%s232] sm:%s225]
          %235 = vst [vmem:[%s233] sm:%s225] %v234
        $region143: #{model_forward.1} parent=137 // loop_footer
          %s231 = sadd.s32 1, %s227
        $region144: #{model_forward.1} parent=137 // loop_footer_branch
          %226 = sbr.rel target = $region140
        $region145: #{model_forward.1} parent=137 // loop_exit
          _
      $region138: #{model_forward.1} parent=122 // pred_fallthru
        _
    $region123: #{model_forward.1} parent=1 // pred_fallthru
      _
    // Predicated region
    $region124: #{model_forward.1} parent=1 // pred_check
      %p199 = pneg %p195
    $region125: #{model_forward.1} parent=1 // pred_check_branch
      %201 = sbr.rel (%p199) target = $region127
    $region126: #{model_forward.1} parent=1 // pred_region
      %s202 = sshll.u32 1, 1
      %s203 = ssub.s32 %s202, 1
      loop: start=0, step=1, limit=1
      $region128: #{model_forward.1} parent=126 // loop_pre_header
        _
      $region129: #{model_forward.1} parent=126 // loop_header
        %s205 = sphi 0, %s209
        %p206 = scmp.ge.s32.totalorder %s205, 1
        %s210 = sphi %s191, %s191
        %s211 = sphi %s192, %s192
      $region130: #{model_forward.1} parent=126 // loop_header_branch
        %208 = sbr.rel (%p206) target = $region134
      $region131: #{model_forward.1} parent=126 // loop_body
        %v212 = vld [vmem:[%s210] sm:%s203]
        %213 = vst [vmem:[%s211] sm:%s203] %v212
      $region132: #{model_forward.1} parent=126 // loop_footer
        %s209 = sadd.s32 1, %s205
      $region133: #{model_forward.1} parent=126 // loop_footer_branch
        %204 = sbr.rel target = $region129
      $region134: #{model_forward.1} parent=126 // loop_exit
        _
    $region127: #{model_forward.1} parent=1 // pred_fallthru
      _
    // Predicated region
    $region146: #{model_forward.1} parent=1 // pred_check
      _
    $region147: #{model_forward.1} parent=1 // pred_check_branch
      %238 = sbr.rel (0) target = $region149
    $region148: #{model_forward.1} parent=1 // pred_region
      %239 = vsyncadd %s193, 16
    $region149: #{model_forward.1} parent=1 // pred_fallthru
      _
    %s240 = sld [smem:[#allocation5 + $0x4]]
    %s241 = scalar_lea.vmem %s1, %s240
    %s242 = scalar_lea.vmem [#allocation2], 4
    %s243 = scalar_lea.sflag [#allocation3], 4
    %p245 = scmp.lt.u32.totalorder 1, 8
    %p246 = pneg %p245
    // Predicated region
    $region150: #{model_forward.1} parent=1 // pred_check
      _
    $region151: #{model_forward.1} parent=1 // pred_check_branch
      %248 = sbr.rel (%p245) target = $region153
    $region152: #{model_forward.1} parent=1 // pred_region
      %s264 = sand.u32 1, 7
      %p265 = scmp.eq.s32.totalorder %s264, 0
      %p266 = pneg %p265
      // Predicated region
      $region165: #{model_forward.1} parent=152 // pred_check
        _
      $region166: #{model_forward.1} parent=152 // pred_check_branch
        %268 = sbr.rel (%p265) target = $region168
      $region167: #{model_forward.1} parent=152 // pred_region
        %s269 = sand.u32 1, 7
        %s270 = ssub.s32 1, %s269
        %s271 = scalar_lea.vmem %s241, %s270
        %s272 = ssub.s32 1, %s269
        %s273 = scalar_lea.vmem %s242, %s272 [#allocation2]
        %s274 = sshll.u32 1, %s269
        %s275 = ssub.s32 %s274, 1
        loop: start=0, step=1, limit=1
        $region169: #{model_forward.1} parent=167 // loop_pre_header
          _
        $region170: #{model_forward.1} parent=167 // loop_header
          %s277 = sphi 0, %s281
          %p278 = scmp.ge.s32.totalorder %s277, 1
          %s282 = sphi %s271, %s271
          %s283 = sphi %s273, %s273
        $region171: #{model_forward.1} parent=167 // loop_header_branch
          %280 = sbr.rel (%p278) target = $region175
        $region172: #{model_forward.1} parent=167 // loop_body
          %v284 = vld [vmem:[%s282] sm:%s275]
          %285 = vst [vmem:[%s283] sm:%s275] %v284
        $region173: #{model_forward.1} parent=167 // loop_footer
          %s281 = sadd.s32 1, %s277
        $region174: #{model_forward.1} parent=167 // loop_footer_branch
          %276 = sbr.rel target = $region170
        $region175: #{model_forward.1} parent=167 // loop_exit
          _
      $region168: #{model_forward.1} parent=152 // pred_fallthru
        _
    $region153: #{model_forward.1} parent=1 // pred_fallthru
      _
    // Predicated region
    $region154: #{model_forward.1} parent=1 // pred_check
      %p249 = pneg %p245
    $region155: #{model_forward.1} parent=1 // pred_check_branch
      %251 = sbr.rel (%p249) target = $region157
    $region156: #{model_forward.1} parent=1 // pred_region
      %s252 = sshll.u32 1, 1
      %s253 = ssub.s32 %s252, 1
      loop: start=0, step=1, limit=1
      $region158: #{model_forward.1} parent=156 // loop_pre_header
        _
      $region159: #{model_forward.1} parent=156 // loop_header
        %s255 = sphi 0, %s259
        %p256 = scmp.ge.s32.totalorder %s255, 1
        %s260 = sphi %s241, %s241
        %s261 = sphi %s242, %s242
      $region160: #{model_forward.1} parent=156 // loop_header_branch
        %258 = sbr.rel (%p256) target = $region164
      $region161: #{model_forward.1} parent=156 // loop_body
        %v262 = vld [vmem:[%s260] sm:%s253]
        %263 = vst [vmem:[%s261] sm:%s253] %v262
      $region162: #{model_forward.1} parent=156 // loop_footer
        %s259 = sadd.s32 1, %s255
      $region163: #{model_forward.1} parent=156 // loop_footer_branch
        %254 = sbr.rel target = $region159
      $region164: #{model_forward.1} parent=156 // loop_exit
        _
    $region157: #{model_forward.1} parent=1 // pred_fallthru
      _
    // Predicated region
    $region176: #{model_forward.1} parent=1 // pred_check
      _
    $region177: #{model_forward.1} parent=1 // pred_check_branch
      %288 = sbr.rel (0) target = $region179
    $region178: #{model_forward.1} parent=1 // pred_region
      %289 = vsyncadd %s243, 16
    $region179: #{model_forward.1} parent=1 // pred_fallthru
      _
    %s290 = sld [smem:[#allocation5 + $0x5]]
    %s291 = scalar_lea.vmem %s1, %s290
    %s292 = scalar_lea.vmem [#allocation2], 5
    %s293 = scalar_lea.sflag [#allocation3], 5
    %p295 = scmp.lt.u32.totalorder 1, 8
    %p296 = pneg %p295
    // Predicated region
    $region180: #{model_forward.1} parent=1 // pred_check
      _
    $region181: #{model_forward.1} parent=1 // pred_check_branch
      %298 = sbr.rel (%p295) target = $region183
    $region182: #{model_forward.1} parent=1 // pred_region
      %s314 = sand.u32 1, 7
      %p315 = scmp.eq.s32.totalorder %s314, 0
      %p316 = pneg %p315
      // Predicated region
      $region195: #{model_forward.1} parent=182 // pred_check
        _
      $region196: #{model_forward.1} parent=182 // pred_check_branch
        %318 = sbr.rel (%p315) target = $region198
      $region197: #{model_forward.1} parent=182 // pred_region
        %s319 = sand.u32 1, 7
        %s320 = ssub.s32 1, %s319
        %s321 = scalar_lea.vmem %s291, %s320
        %s322 = ssub.s32 1, %s319
        %s323 = scalar_lea.vmem %s292, %s322 [#allocation2]
        %s324 = sshll.u32 1, %s319
        %s325 = ssub.s32 %s324, 1
        loop: start=0, step=1, limit=1
        $region199: #{model_forward.1} parent=197 // loop_pre_header
          _
        $region200: #{model_forward.1} parent=197 // loop_header
          %s327 = sphi 0, %s331
          %p328 = scmp.ge.s32.totalorder %s327, 1
          %s332 = sphi %s321, %s321
          %s333 = sphi %s323, %s323
        $region201: #{model_forward.1} parent=197 // loop_header_branch
          %330 = sbr.rel (%p328) target = $region205
        $region202: #{model_forward.1} parent=197 // loop_body
          %v334 = vld [vmem:[%s332] sm:%s325]
          %335 = vst [vmem:[%s333] sm:%s325] %v334
        $region203: #{model_forward.1} parent=197 // loop_footer
          %s331 = sadd.s32 1, %s327
        $region204: #{model_forward.1} parent=197 // loop_footer_branch
          %326 = sbr.rel target = $region200
        $region205: #{model_forward.1} parent=197 // loop_exit
          _
      $region198: #{model_forward.1} parent=182 // pred_fallthru
        _
    $region183: #{model_forward.1} parent=1 // pred_fallthru
      _
    // Predicated region
    $region184: #{model_forward.1} parent=1 // pred_check
      %p299 = pneg %p295
    $region185: #{model_forward.1} parent=1 // pred_check_branch
      %301 = sbr.rel (%p299) target = $region187
    $region186: #{model_forward.1} parent=1 // pred_region
      %s302 = sshll.u32 1, 1
      %s303 = ssub.s32 %s302, 1
      loop: start=0, step=1, limit=1
      $region188: #{model_forward.1} parent=186 // loop_pre_header
        _
      $region189: #{model_forward.1} parent=186 // loop_header
        %s305 = sphi 0, %s309
        %p306 = scmp.ge.s32.totalorder %s305, 1
        %s310 = sphi %s291, %s291
        %s311 = sphi %s292, %s292
      $region190: #{model_forward.1} parent=186 // loop_header_branch
        %308 = sbr.rel (%p306) target = $region194
      $region191: #{model_forward.1} parent=186 // loop_body
        %v312 = vld [vmem:[%s310] sm:%s303]
        %313 = vst [vmem:[%s311] sm:%s303] %v312
      $region192: #{model_forward.1} parent=186 // loop_footer
        %s309 = sadd.s32 1, %s305
      $region193: #{model_forward.1} parent=186 // loop_footer_branch
        %304 = sbr.rel target = $region189
      $region194: #{model_forward.1} parent=186 // loop_exit
        _
    $region187: #{model_forward.1} parent=1 // pred_fallthru
      _
    // Predicated region
    $region206: #{model_forward.1} parent=1 // pred_check
      _
    $region207: #{model_forward.1} parent=1 // pred_check_branch
      %338 = sbr.rel (0) target = $region209
    $region208: #{model_forward.1} parent=1 // pred_region
      %339 = vsyncadd %s293, 16
    $region209: #{model_forward.1} parent=1 // pred_fallthru
      _
    %s340 = sld [smem:[#allocation5 + $0x6]]
    %s341 = scalar_lea.vmem %s1, %s340
    %s342 = scalar_lea.vmem [#allocation2], 6
    %s343 = scalar_lea.sflag [#allocation3], 6
    %p345 = scmp.lt.u32.totalorder 1, 8
    %p346 = pneg %p345
    // Predicated region
    $region210: #{model_forward.1} parent=1 // pred_check
      _
    $region211: #{model_forward.1} parent=1 // pred_check_branch
      %348 = sbr.rel (%p345) target = $region213
    $region212: #{model_forward.1} parent=1 // pred_region
      %s364 = sand.u32 1, 7
      %p365 = scmp.eq.s32.totalorder %s364, 0
      %p366 = pneg %p365
      // Predicated region
      $region225: #{model_forward.1} parent=212 // pred_check
        _
      $region226: #{model_forward.1} parent=212 // pred_check_branch
        %368 = sbr.rel (%p365) target = $region228
      $region227: #{model_forward.1} parent=212 // pred_region
        %s369 = sand.u32 1, 7
        %s370 = ssub.s32 1, %s369
        %s371 = scalar_lea.vmem %s341, %s370
        %s372 = ssub.s32 1, %s369
        %s373 = scalar_lea.vmem %s342, %s372 [#allocation2]
        %s374 = sshll.u32 1, %s369
        %s375 = ssub.s32 %s374, 1
        loop: start=0, step=1, limit=1
        $region229: #{model_forward.1} parent=227 // loop_pre_header
          _
        $region230: #{model_forward.1} parent=227 // loop_header
          %s377 = sphi 0, %s381
          %p378 = scmp.ge.s32.totalorder %s377, 1
          %s382 = sphi %s371, %s371
          %s383 = sphi %s373, %s373
        $region231: #{model_forward.1} parent=227 // loop_header_branch
          %380 = sbr.rel (%p378) target = $region235
        $region232: #{model_forward.1} parent=227 // loop_body
          %v384 = vld [vmem:[%s382] sm:%s375]
          %385 = vst [vmem:[%s383] sm:%s375] %v384
        $region233: #{model_forward.1} parent=227 // loop_footer
          %s381 = sadd.s32 1, %s377
        $region234: #{model_forward.1} parent=227 // loop_footer_branch
          %376 = sbr.rel target = $region230
        $region235: #{model_forward.1} parent=227 // loop_exit
          _
      $region228: #{model_forward.1} parent=212 // pred_fallthru
        _
    $region213: #{model_forward.1} parent=1 // pred_fallthru
      _
    // Predicated region
    $region214: #{model_forward.1} parent=1 // pred_check
      %p349 = pneg %p345
    $region215: #{model_forward.1} parent=1 // pred_check_branch
      %351 = sbr.rel (%p349) target = $region217
    $region216: #{model_forward.1} parent=1 // pred_region
      %s352 = sshll.u32 1, 1
      %s353 = ssub.s32 %s352, 1
      loop: start=0, step=1, limit=1
      $region218: #{model_forward.1} parent=216 // loop_pre_header
        _
      $region219: #{model_forward.1} parent=216 // loop_header
        %s355 = sphi 0, %s359
        %p356 = scmp.ge.s32.totalorder %s355, 1
        %s360 = sphi %s341, %s341
        %s361 = sphi %s342, %s342
      $region220: #{model_forward.1} parent=216 // loop_header_branch
        %358 = sbr.rel (%p356) target = $region224
      $region221: #{model_forward.1} parent=216 // loop_body
        %v362 = vld [vmem:[%s360] sm:%s353]
        %363 = vst [vmem:[%s361] sm:%s353] %v362
      $region222: #{model_forward.1} parent=216 // loop_footer
        %s359 = sadd.s32 1, %s355
      $region223: #{model_forward.1} parent=216 // loop_footer_branch
        %354 = sbr.rel target = $region219
      $region224: #{model_forward.1} parent=216 // loop_exit
        _
    $region217: #{model_forward.1} parent=1 // pred_fallthru
      _
    // Predicated region
    $region236: #{model_forward.1} parent=1 // pred_check
      _
    $region237: #{model_forward.1} parent=1 // pred_check_branch
      %388 = sbr.rel (0) target = $region239
    $region238: #{model_forward.1} parent=1 // pred_region
      %389 = vsyncadd %s343, 16
    $region239: #{model_forward.1} parent=1 // pred_fallthru
      _
    %s390 = sld [smem:[#allocation5 + $0x7]]
    %s391 = scalar_lea.vmem %s1, %s390
    %s392 = scalar_lea.vmem [#allocation2], 7
    %s393 = scalar_lea.sflag [#allocation3], 7
    %p395 = scmp.lt.u32.totalorder 1, 8
    %p396 = pneg %p395
    // Predicated region
    $region240: #{model_forward.1} parent=1 // pred_check
      _
    $region241: #{model_forward.1} parent=1 // pred_check_branch
      %398 = sbr.rel (%p395) target = $region243
    $region242: #{model_forward.1} parent=1 // pred_region
      %s414 = sand.u32 1, 7
      %p415 = scmp.eq.s32.totalorder %s414, 0
      %p416 = pneg %p415
      // Predicated region
      $region255: #{model_forward.1} parent=242 // pred_check
        _
      $region256: #{model_forward.1} parent=242 // pred_check_branch
        %418 = sbr.rel (%p415) target = $region258
      $region257: #{model_forward.1} parent=242 // pred_region
        %s419 = sand.u32 1, 7
        %s420 = ssub.s32 1, %s419
        %s421 = scalar_lea.vmem %s391, %s420
        %s422 = ssub.s32 1, %s419
        %s423 = scalar_lea.vmem %s392, %s422 [#allocation2]
        %s424 = sshll.u32 1, %s419
        %s425 = ssub.s32 %s424, 1
        loop: start=0, step=1, limit=1
        $region259: #{model_forward.1} parent=257 // loop_pre_header
          _
        $region260: #{model_forward.1} parent=257 // loop_header
          %s427 = sphi 0, %s431
          %p428 = scmp.ge.s32.totalorder %s427, 1
          %s432 = sphi %s421, %s421
          %s433 = sphi %s423, %s423
        $region261: #{model_forward.1} parent=257 // loop_header_branch
          %430 = sbr.rel (%p428) target = $region265
        $region262: #{model_forward.1} parent=257 // loop_body
          %v434 = vld [vmem:[%s432] sm:%s425]
          %435 = vst [vmem:[%s433] sm:%s425] %v434
        $region263: #{model_forward.1} parent=257 // loop_footer
          %s431 = sadd.s32 1, %s427
        $region264: #{model_forward.1} parent=257 // loop_footer_branch
          %426 = sbr.rel target = $region260
        $region265: #{model_forward.1} parent=257 // loop_exit
          _
      $region258: #{model_forward.1} parent=242 // pred_fallthru
        _
    $region243: #{model_forward.1} parent=1 // pred_fallthru
      _
    // Predicated region
    $region244: #{model_forward.1} parent=1 // pred_check
      %p399 = pneg %p395
    $region245: #{model_forward.1} parent=1 // pred_check_branch
      %401 = sbr.rel (%p399) target = $region247
    $region246: #{model_forward.1} parent=1 // pred_region
      %s402 = sshll.u32 1, 1
      %s403 = ssub.s32 %s402, 1
      loop: start=0, step=1, limit=1
      $region248: #{model_forward.1} parent=246 // loop_pre_header
        _
      $region249: #{model_forward.1} parent=246 // loop_header
        %s405 = sphi 0, %s409
        %p406 = scmp.ge.s32.totalorder %s405, 1
        %s410 = sphi %s391, %s391
        %s411 = sphi %s392, %s392
      $region250: #{model_forward.1} parent=246 // loop_header_branch
        %408 = sbr.rel (%p406) target = $region254
      $region251: #{model_forward.1} parent=246 // loop_body
        %v412 = vld [vmem:[%s410] sm:%s403]
        %413 = vst [vmem:[%s411] sm:%s403] %v412
      $region252: #{model_forward.1} parent=246 // loop_footer
        %s409 = sadd.s32 1, %s405
      $region253: #{model_forward.1} parent=246 // loop_footer_branch
        %404 = sbr.rel target = $region249
      $region254: #{model_forward.1} parent=246 // loop_exit
        _
    $region247: #{model_forward.1} parent=1 // pred_fallthru
      _
    // Predicated region
    $region266: #{model_forward.1} parent=1 // pred_check
      _
    $region267: #{model_forward.1} parent=1 // pred_check_branch
      %438 = sbr.rel (0) target = $region269
    $region268: #{model_forward.1} parent=1 // pred_region
      %439 = vsyncadd %s393, 16
    $region269: #{model_forward.1} parent=1 // pred_fallthru
      _
    %s440 = sld [smem:[#allocation5]]
    %s441 = smul.u32 1, 1
    %s442 = sshll.u32 %s441, 4
    %443 = dma.done [#allocation3], %s442
    %s444 = sld [smem:[#allocation5 + $0x1]]
    %s445 = sshll.u32 %s441, 4
    %446 = dma.done %s93, %s445
    %s447 = sld [smem:[#allocation5 + $0x2]]
    %s448 = sshll.u32 %s441, 4
    %449 = dma.done %s143, %s448
    %s450 = sld [smem:[#allocation5 + $0x3]]
    %s451 = sshll.u32 %s441, 4
    %452 = dma.done %s193, %s451
    %s453 = sld [smem:[#allocation5 + $0x4]]
    %s454 = sshll.u32 %s441, 4
    %455 = dma.done %s243, %s454
    %s456 = sld [smem:[#allocation5 + $0x5]]
    %s457 = sshll.u32 %s441, 4
    %458 = dma.done %s293, %s457
    %s459 = sld [smem:[#allocation5 + $0x6]]
    %s460 = sshll.u32 %s441, 4
    %461 = dma.done %s343, %s460
    %s462 = sld [smem:[#allocation5 + $0x7]]
    %s463 = sshll.u32 %s441, 4
    %464 = dma.done %s393, %s463
    %v465 = vld [vmem:[#allocation2] sm:$0xff]
    %v466 = vpack.c.bf16 %v465, %v465
    %v467 = vld [vmem:[%s2] sm:$0xf]
    %v468 = vld [vmem:[%s2 + $0x4] sm:$0xf]
    %v469 = vld [vmem:[%s2 + $0x8] sm:$0xf]
    %v470 = vld [vmem:[%s2 + $0xc] sm:$0xf]
    %v471 = vld [vmem:[%s2 + $0x10] sm:$0xf]
    %v472 = vld [vmem:[%s2 + $0x14] sm:$0xf]
    %v473 = vld [vmem:[%s2 + $0x18] sm:$0xf]
    %v474 = vld [vmem:[%s2 + $0x1c] sm:$0xf]
    %v475 = vld [vmem:[%s2 + $0x20] sm:$0xf]
    %v476 = vld [vmem:[%s2 + $0x24] sm:$0xf]
    %v477 = vld [vmem:[%s2 + $0x28] sm:$0xf]
    %v478 = vld [vmem:[%s2 + $0x2c] sm:$0xf]
    %v479 = vld [vmem:[%s2 + $0x30] sm:$0xf]
    %v480 = vld [vmem:[%s2 + $0x34] sm:$0xf]
    %v481 = vld [vmem:[%s2 + $0x38] sm:$0xf]
    %v482 = vld [vmem:[%s2 + $0x3c] sm:$0xf]
    %v483 = vld [vmem:[%s3] sm:$0x1]
    %v485 = vlaneseq
    %v486 = vshrl.u32 %v485, 7
    %v487 = vsub.s32 0, %v486
    %v488 = vrot.slane %v483, %v487
    %v506 = vunpack.c.l.b16 %v467
    %v507 = vunpack.c.l.b16 %v468
    %v508 = vunpack.c.l.b16 %v469
    %v509 = vunpack.c.l.b16 %v470
    %v510 = vunpack.c.l.b16 %v471
    %v511 = vunpack.c.l.b16 %v472
    %v512 = vunpack.c.l.b16 %v473
    %v513 = vunpack.c.l.b16 %v474
    %v514 = vunpack.c.l.b16 %v475
    %v515 = vunpack.c.l.b16 %v476
    %v516 = vunpack.c.l.b16 %v477
    %v517 = vunpack.c.l.b16 %v478
    %v518 = vunpack.c.l.b16 %v479
    %v519 = vunpack.c.l.b16 %v480
    %v520 = vunpack.c.l.b16 %v481
    %v521 = vunpack.c.l.b16 %v482
    %v522 = vpack.c.b16 %v507, %v506
    %v523 = vpack.c.b16 %v509, %v508
    %v524 = vpack.c.b16 %v511, %v510
    %v525 = vpack.c.b16 %v513, %v512
    %v526 = vpack.c.b16 %v515, %v514
    %v527 = vpack.c.b16 %v517, %v516
    %v528 = vpack.c.b16 %v519, %v518
    %v529 = vpack.c.b16 %v521, %v520
    %538 = vmatprep.subr.bf16.mxu0 0
    %539 = vmatpush1.bf16.msra.mxu0 %v529
    %540 = vmatprep.subr.bf16.mxu0 0
    %541 = vmatpush1.bf16.msra.mxu0 %v528
    %542 = vmatprep.subr.bf16.mxu0 0
    %543 = vmatpush1.bf16.msra.mxu0 %v527
    %544 = vmatprep.subr.bf16.mxu0 0
    %545 = vmatpush1.bf16.msra.mxu0 %v526
    %546 = vmatprep.subr.bf16.mxu0 0
    %547 = vmatpush1.bf16.msra.mxu0 %v525
    %548 = vmatprep.subr.bf16.mxu0 0
    %549 = vmatpush1.bf16.msra.mxu0 %v524
    %550 = vmatprep.subr.bf16.mxu0 0
    %551 = vmatpush1.bf16.msra.mxu0 %v523
    %552 = vmatprep.subr.bf16.mxu0 0
    %553 = vmatpush1.bf16.msra.mxu0 %v522
    %554 = vmatprep.subr.bf16.mxu0 0
    %555 = vmatpush2.bf16.msra.mxu0 0
    %556 = vmatprep.subr.bf16.mxu0 0
    %557 = vmatpush2.bf16.msra.mxu0 0
    %558 = vmatprep.subr.bf16.mxu0 0
    %559 = vmatpush2.bf16.msra.mxu0 0
    %560 = vmatprep.subr.bf16.mxu0 0
    %561 = vmatpush2.bf16.msra.mxu0 0
    %562 = vmatprep.subr.bf16.mxu0 0
    %563 = vmatpush2.bf16.msra.mxu0 0
    %564 = vmatprep.subr.bf16.mxu0 0
    %565 = vmatpush2.bf16.msra.mxu0 0
    %566 = vmatprep.subr.bf16.mxu0 0
    %567 = vmatpush2.bf16.msra.mxu0 0
    %568 = vmatprep.subr.bf16.mxu0 0
    %569 = vmatpush2.bf16.msra.mxu0 0
    %570 = vmatprep.mubr.bf16.mxu0 0
    %571 = vmatmul.mubr.bf16.gmra.mxu0 %v466
    %v572 = vpop.f32.mrf.mxu0
    %v573 = vadd.f32 %v488, %v572
    %v574 = vpop.f32.mrf.mxu0
    %v575 = vpop.f32.mrf.mxu0
    %v576 = vpop.f32.mrf.mxu0
    %577 = vdwg.mxu0
    %v578 = vtanh.pop %v573
    %v579 = vld [vmem:[%s4] sm:$0x1]
    %v581 = vlaneseq
    %v582 = vshrl.u32 %v581, 7
    %v583 = vsub.s32 0, %v582
    %v584 = vrot.slane %v579, %v583
    %v586 = vmul.f32 %v578, %v584
    %587 = vadd.xlane.f32.xlu0 %v586
    %v588 = vpop.xlane.xlu0 %587
    %s589 = sld [smem:[#allocation4]]
    %v590 = vstv %s589
    %v591 = vadd.f32 %v588, %v590
    %v592 = vsub.f32 0.0, %v591
    %v593 = vmul.f32 %v592, 1.442695
    %v594 = vpow.pop %v593
    %v595 = vadd.f32 %v594, 1.0
    %v596 = vrcp.pop %v595
    %v597 = vmul.f32 1.0, %v596
    %v598 = vld [vmem:[%s6] sm:$0xff]
    %v599 = vadd.f32 %v597, 1e-10
    %v600 = vlog2.pop %v599
    %v601 = vmul.f32 %v600, 0.6931472
    %v602 = vmul.f32 %v601, %v598
    %v603 = vsub.f32 1.0, %v597
    %v604 = vadd.f32 %v603, 1e-10
    %v605 = vlog2.pop %v604
    %v606 = vmul.f32 %v605, 0.6931472
    %v607 = vsub.f32 1.0, %v598
    %v608 = vmul.f32 %v606, %v607
    %v609 = vadd.f32 %v602, %v608
    %vm610 = vcmask 7168
    %v611 = vsel %vm610, %v609, 0.0
    %v612 = vrot.slane %v611, 4
    %v613 = vadd.f32 %v611, %v612
    %v614 = vrot.slane %v613, 2
    %v615 = vadd.f32 %v613, %v614
    %v616 = vrot.slane %v615, 1
    %v617 = vadd.f32 %v615, %v616
    %v618 = vsub.f32 0.0, %v617
    %v619 = vmul.f32 %v618, 0.125
    %620 = vst [vmem:[%s7] sm:$0xff] %v597
    %622 = vset.pattern.permute.xlu0 0
    %623 = vperm.xlu0 %622, %v619
    %v624 = vpop.permute.xlu0 %623
    %626 = vst [vmem:[#allocation8] sm:$0x1] %v624
    // Predicated region
    $region270: #{model_forward.1} parent=1 // pred_check
      _
    $region271: #{model_forward.1} parent=1 // pred_check_branch
      %628 = sbr.rel (0) target = $region273
    $region272: #{model_forward.1} parent=1 // pred_region
      _
    $region273: #{model_forward.1} parent=1 // pred_fallthru
      _
    // Predicated region
    $region274: #{model_forward.1} parent=1 // pred_check
      _
    $region275: #{model_forward.1} parent=1 // pred_check_branch
      %630 = sbr.rel (0) target = $region277
    $region276: #{model_forward.1} parent=1 // pred_region
      %s632 = ssub.s32 16, 16
      %633 = vsyncadd [#allocation6], %s632
      %s635 = sshll.u32 [#allocation8], 4
      %s636 = int_to_ptr.vmem [resolvable:$true] %s635
      %638 = dma.vmem_to_hbm [thread:$0]  %s636, 16, %s8, [#allocation6]
    $region277: #{model_forward.1} parent=1 // pred_fallthru
      _
    // Predicated region
    $region278: #{model_forward.1} parent=1 // pred_check
      _
    $region279: #{model_forward.1} parent=1 // pred_check_branch
      %640 = sbr.rel (0) target = $region281
    $region280: #{model_forward.1} parent=1 // pred_region
      _
    $region281: #{model_forward.1} parent=1 // pred_fallthru
      _
    // Predicated region
    $region282: #{model_forward.1} parent=1 // pred_check
      _
    $region283: #{model_forward.1} parent=1 // pred_check_branch
      %642 = sbr.rel (0) target = $region285
    $region284: #{model_forward.1} parent=1 // pred_region
      %643 = dma.done [#allocation6], 16
    $region285: #{model_forward.1} parent=1 // pred_fallthru
      _
    %644 = vsyncpa [#allocation6], 1
    %645 = vsyncpa [#allocation7], 1
  %646 = vsyncmov [#allocation3]
  %s647 = vpop.sfrf %646
  %p648 = scmp.eq.s32.totalorder %s647, 0
  %p649 = pneg %p648
  %651 = shalt.err (%p649)
  %s652 = scalar_lea.sflag [#allocation3], 1
  %653 = vsyncmov %s652
  %s654 = vpop.sfrf %653
  %p655 = scmp.eq.s32.totalorder %s654, 0
  %p656 = pneg %p655
  %658 = shalt.err (%p656)
  %s659 = scalar_lea.sflag [#allocation3], 2
  %660 = vsyncmov %s659
  %s661 = vpop.sfrf %660
  %p662 = scmp.eq.s32.totalorder %s661, 0
  %p663 = pneg %p662
  %665 = shalt.err (%p663)
  %s666 = scalar_lea.sflag [#allocation3], 3
  %667 = vsyncmov %s666
  %s668 = vpop.sfrf %667
  %p669 = scmp.eq.s32.totalorder %s668, 0
  %p670 = pneg %p669
  %672 = shalt.err (%p670)
  %s673 = scalar_lea.sflag [#allocation3], 4
  %674 = vsyncmov %s673
  %s675 = vpop.sfrf %674
  %p676 = scmp.eq.s32.totalorder %s675, 0
  %p677 = pneg %p676
  %679 = shalt.err (%p677)
  %s680 = scalar_lea.sflag [#allocation3], 5
  %681 = vsyncmov %s680
  %s682 = vpop.sfrf %681
  %p683 = scmp.eq.s32.totalorder %s682, 0
  %p684 = pneg %p683
  %686 = shalt.err (%p684)
  %s687 = scalar_lea.sflag [#allocation3], 6
  %688 = vsyncmov %s687
  %s689 = vpop.sfrf %688
  %p690 = scmp.eq.s32.totalorder %s689, 0
  %p691 = pneg %p690
  %693 = shalt.err (%p691)
  %s694 = scalar_lea.sflag [#allocation3], 7
  %695 = vsyncmov %s694
  %s696 = vpop.sfrf %695
  %p697 = scmp.eq.s32.totalorder %s696, 0
  %p698 = pneg %p697
  %700 = shalt.err (%p698)

</llo_original>
